<compile_context>
chip_gen: v7x
topology: tpu7x:2x2x1
jax: 0.10.0
libtpu: 0.0.40
codegen_flags: <defaults>
</compile_context>

<pallas_src>
import functools

import jax
import jax.numpy as jnp
from jax import lax
from jax.experimental import pallas as pl
from jax.experimental.pallas import tpu as pltpu

_LANE = 128
_SUBLANE = 8


def _normals_loss_kernel(out_ref, label_ref, loss_ref, *cnt_refs,
                         ignore_label, normalize, need_count, compute_dtype,
                         valid_rows, block_rows, s_inner, needs_row_mask):
    """Processes one (C, block_rows, 128) spatial tile of one batch element.

    out_ref / label_ref : (C, BR, 128) input tiles (native dtype, cast here).
    loss_ref (/cnt_ref) : (1, 8, 128) f32 partial accumulators, resident across
                          the innermost ("arbitrary") grid axis.
    """
    cnt_ref = cnt_refs[0] if need_count else None
    si = pl.program_id(2)

    @pl.when(si == 0)
    def _():
        loss_ref[...] = jnp.zeros_like(loss_ref)
        if need_count:
            cnt_ref[...] = jnp.zeros_like(cnt_ref)

    x = out_ref[...].astype(compute_dtype)      # (C, BR, 128)
    y = label_ref[...].astype(compute_dtype)    # (C, BR, 128)

    valid = y != jnp.asarray(ignore_label, compute_dtype)   # (C, BR, 128)

    if needs_row_mask:
        # Last spatial tile is a partial boundary block: rows >= valid_rows of
        # the VMEM buffer hold unspecified data -> mask them out.
        tile = pl.program_id(1) * s_inner + si
        row = lax.broadcasted_iota(jnp.int32, (x.shape[1], x.shape[2]), 0)
        row_ok = (row + tile * block_rows) < valid_rows      # (BR, 128)
        valid = jnp.logical_and(valid, row_ok[None])

    if normalize:
        # Per-pixel L2 norm over the channel axis.  rsqrt goes to the EUP slot
        # (VALU stays free).  Epsilon sits inside the sqrt (the reference adds
        # 1e-12 outside) -- negligible difference for a loss value.
        sumsq = jnp.sum(x * x, axis=0, keepdims=True)        # (1, BR, 128)
        inv = lax.rsqrt(sumsq.astype(jnp.float32) + jnp.float32(1e-24))
        x = x * inv.astype(compute_dtype)

    # where() (rather than multiply-by-mask) also protects against NaN/Inf in
    # the unspecified rows of a partial boundary block.
    diff = jnp.where(valid, jnp.abs(x - y), jnp.asarray(0, compute_dtype))

    def _accumulate(acc_ref, v):                # v: (BR, 128) f32
        br = v.shape[0]
        if br % _SUBLANE == 0:
            v8 = v if br == _SUBLANE else (
                v.reshape(br // _SUBLANE, _SUBLANE, _LANE).sum(axis=0))
            acc_ref[0] = acc_ref[0] + v8
        else:
            # Single-tile case with a row count that is not a multiple of 8:
            # fold everything into sublane 0 of the (8, 128) accumulator.
            row_sum = jnp.sum(v, axis=0, keepdims=True)       # (1, 128)
            sub = lax.broadcasted_iota(jnp.int32, (_SUBLANE, _LANE), 0)
            acc_ref[0] = acc_ref[0] + jnp.where(sub == 0, row_sum,
                                                jnp.float32(0))

    # Channel reduction in the compute dtype (a few cheap adds), everything
    # after that (sublane fold + accumulation) in f32.
    _accumulate(loss_ref, jnp.sum(diff, axis=0).astype(jnp.float32))
    if need_count:
        cnt = jnp.sum(valid.astype(compute_dtype), axis=0).astype(jnp.float32)
        _accumulate(cnt_ref, cnt)


def _round_up(x, m):
    return ((x + m - 1) // m) * m


def _device_defaults():
    """(target_tile_bytes, vmem_limit_bytes_or_None, bf16_valu_ok)."""
    kind = ""
    try:
        kind = jax.devices()[0].device_kind.lower()
    except Exception:
        pass
    if "v6" in kind:
        # 128 MiB physical VMEM: larger tiles + explicit scoped-VMEM raise.
        return 4 * 1024 * 1024, 64 * 1024 * 1024, True
    if "v7" in kind or "tpu7" in kind:
        # 64 MiB physical VMEM per TC: keep tiles modest, default scoped limit.
        return 2 * 1024 * 1024, None, True
    if "v5" in kind:
        # No bf16 VALU path; 128 MiB physical VMEM.
        return 2 * 1024 * 1024, 64 * 1024 * 1024, False
    return 2 * 1024 * 1024, None, False


def normals_loss(out, label, *, ignore_label=255, normalize=False,
                 size_average=True, target_tile_bytes=None,
                 compute_in_bf16=None, split_spatial=None):
    """Pallas implementation of NormalsLoss.forward (norm=1 / L1)."""
    assert out.shape == label.shape
    N, C, H, W = out.shape
    HW = H * W

    auto_tile, vmem_limit, bf16_ok = _device_defaults()
    if target_tile_bytes is None:
        target_tile_bytes = auto_tile
    if compute_in_bf16 is None:
        compute_in_bf16 = (bf16_ok
                           and out.dtype == jnp.bfloat16
                           and label.dtype == jnp.bfloat16)
    compute_dtype = jnp.bfloat16 if compute_in_bf16 else jnp.float32
    need_count = bool(size_average) and bool(ignore_label)

    out_r = out.reshape(N, C, HW)
    label_r = label.reshape(N, C, HW)
    if HW % _LANE != 0:
        # TODO(synk): lane-tail fallback still materializes padded copies in
        # HBM; only hit when H*W is not a multiple of 128.
        pad = _round_up(HW, _LANE) - HW
        out_r = jnp.pad(out_r, ((0, 0), (0, 0), (0, pad)))
        label_r = jnp.pad(label_r, ((0, 0), (0, 0), (0, pad)),
                          constant_values=float(ignore_label))

    r0 = out_r.shape[-1] // _LANE             # true number of 128-wide rows
    out_r = out_r.reshape(N, C, r0, _LANE)    # free reshape (contiguous)
    label_r = label_r.reshape(N, C, r0, _LANE)

    itemsize = max(jnp.dtype(out.dtype).itemsize,
                   jnp.dtype(label.dtype).itemsize,
                   jnp.dtype(compute_dtype).itemsize)
    target_rows = max(_SUBLANE, target_tile_bytes // (C * _LANE * itemsize))
    if target_rows >= r0:
        block_rows = r0                       # single tile (full dim allowed)
    else:
        block_rows = max(_SUBLANE, (target_rows // _SUBLANE) * _SUBLANE)

    n_tiles = -(-r0 // block_rows)            # ceil; last tile may be ragged
    needs_row_mask = (n_tiles * block_rows) != r0

    if split_spatial is None:
        split_spatial = (N == 1)              # keep both v7x TCs busy
    s_outer = 2 if (split_spatial and n_tiles >= 2 and n_tiles % 2 == 0) else 1
    s_inner = n_tiles // s_outer

    kernel = functools.partial(
        _normals_loss_kernel,
        ignore_label=float(ignore_label),
        normalize=normalize,
        need_count=need_count,
        compute_dtype=compute_dtype,
        valid_rows=r0,
        block_rows=block_rows,
        s_inner=s_inner,
        needs_row_mask=needs_row_mask,
    )

    grid = (N, s_outer, s_inner)

    in_spec = pl.BlockSpec((pl.Squeezed(), C, block_rows, _LANE),
                           lambda n, so, si: (n, 0, so * s_inner + si, 0))
    part_shape = jax.ShapeDtypeStruct((N * s_outer, _SUBLANE, _LANE),
                                      jnp.float32)
    part_spec = pl.BlockSpec((1, _SUBLANE, _LANE),
                             lambda n, so, si: (n * s_outer + so, 0, 0))

    out_shapes = [part_shape]
    out_specs = [part_spec]
    if need_count:
        out_shapes.append(part_shape)
        out_specs.append(part_spec)

    compiler_kwargs = dict(
        dimension_semantics=("parallel", "parallel", "arbitrary"))
    if vmem_limit is not None:
        compiler_kwargs["vmem_limit_bytes"] = vmem_limit

    results = pl.pallas_call(
        kernel,
        out_shape=tuple(out_shapes),
        grid_spec=pltpu.PrefetchScalarGridSpec(
            num_scalar_prefetch=0,
            grid=grid,
            in_specs=[in_spec, in_spec],
            out_specs=tuple(out_specs),
        ),
        compiler_params=pltpu.CompilerParams(**compiler_kwargs),
    )(out_r, label_r)

    loss_sum = jnp.sum(results[0])

    if size_average:
        if ignore_label:      # value-truthiness, mirrors the PyTorch original
            n_valid = jnp.sum(results[1])
            return loss_sum / jnp.maximum(n_valid, 1e-6)
        return loss_sum / jnp.float32(N * C * H * W)
    return loss_sum


def _reference(out, label, *, ignore_label=255, normalize=False,
               size_average=True):
    """Pure-JAX reference mirroring the PyTorch semantics."""
    out = out.astype(jnp.float32)
    label = label.astype(jnp.float32)
    mask = label != float(ignore_label)
    n_valid = jnp.sum(mask).astype(jnp.float32)
    x = out
    if normalize:
        qn = jnp.sqrt(jnp.sum(out * out, axis=1, keepdims=True)) + 1e-12
        x = out / qn
    loss = jnp.sum(jnp.where(mask, jnp.abs(x - label), 0.0))
    if size_average:
        if ignore_label:
            return loss / jnp.maximum(n_valid, 1e-6)
        return loss / jnp.float32(label.size)
    return loss


if __name__ == "__main__":
    key = jax.random.PRNGKey(0)

    def make_case(k, shape, ignore_frac=0.2, ignore_label=255.0):
        k1, k2, k3 = jax.random.split(k, 3)
        o = jax.random.normal(k1, shape, dtype=jnp.float32)
        l = jax.random.normal(k2, shape, dtype=jnp.float32)
        m = jax.random.bernoulli(k3, p=ignore_frac, shape=shape)
        l = jnp.where(m, jnp.float32(ignore_label), l)
        return o, l

    failures = []

    def check(name, got, want, tol):
        got = jax.block_until_ready(got)
        if not jnp.allclose(got, want, rtol=tol, atol=tol):
            failures.append((name, float(got), float(want)))

    k0, k1, k2, k3 = jax.random.split(key, 4)

    # Primary shape: N=2, C=4, 16x16 (HW=256 -> lane-aligned, single tile).
    o32, l32 = make_case(k0, (2, 4, 16, 16))
    for normalize in (False, True):
        got = normals_loss(o32, l32, ignore_label=255, normalize=normalize)
        want = _reference(o32, l32, ignore_label=255, normalize=normalize)
        check(f"f32 norm={normalize}", got, want, 1e-4)

        ob, lb = o32.astype(jnp.bfloat16), l32.astype(jnp.bfloat16)
        got = normals_loss(ob, lb, ignore_label=255, normalize=normalize)
        want = _reference(ob, lb, ignore_label=255, normalize=normalize)
        check(f"bf16 norm={normalize}", got, want, 5e-2)

    # size_average=False path (valid-count output is skipped entirely).
    got = normals_loss(o32, l32, ignore_label=255, size_average=False)
    want = _reference(o32, l32, ignore_label=255, size_average=False)
    check("sum-reduction", got, want, 1e-4)

    # Multi-tile + spatial megacore split (N=1, 16 rows, block_rows=8).
    o, l = make_case(k1, (1, 3, 32, 64))
    got = normals_loss(o, l, normalize=True, target_tile_bytes=16 * 1024)
    want = _reference(o, l, normalize=True)
    check("split-spatial", got, want, 1e-4)

    # Ragged last tile (20 rows, block_rows=8 -> partial boundary block).
    o, l = make_case(k2, (1, 3, 40, 64))
    got = normals_loss(o, l, normalize=False, target_tile_bytes=16 * 1024)
    want = _reference(o, l, normalize=False)
    check("ragged-rows", got, want, 1e-4)

    # HW not a multiple of 128 (lane-tail pad fallback) + rows < 8.
    o, l = make_case(k3, (2, 3, 10, 10))
    got = normals_loss(o, l, normalize=True)
    want = _reference(o, l, normalize=True)
    check("lane-tail", got, want, 1e-4)

    if failures:
        for name, g, w in failures:
            print(f"MISMATCH {name}: got={g} want={w}")
    else:
        print("KERNEL_OK")
</pallas_src>

<mosaic_0001>
module attributes {stable_mosaic.version = 11 : i64} {
  func.func @_normals_loss_kernel(%arg0: i32, %arg1: i32, %arg2: i32, %arg3: memref<1x4x2x128xf32, #tpu.memory_space<vmem>>, %arg4: memref<1x4x2x128xf32, #tpu.memory_space<vmem>>, %arg5: memref<1x8x128xf32, #tpu.memory_space<vmem>>, %arg6: memref<1x8x128xf32, #tpu.memory_space<vmem>>) attributes {dimension_semantics = [#tpu.dimension_semantics<parallel>, #tpu.dimension_semantics<parallel>, #tpu.dimension_semantics<arbitrary>], iteration_bounds = array<i64: 2, 1, 1>, scalar_prefetch = 0 : i64, scratch_operands = 0 : i64, tpu.core_type = #tpu.core_type<tc>, window_params = [{transform_indices = @transform_0, window_bounds = array<i64: 1, 4, 2, 128>}, {transform_indices = @transform_1, window_bounds = array<i64: 1, 4, 2, 128>}, {transform_indices = @transform_2, window_bounds = array<i64: 1, 8, 128>}, {transform_indices = @transform_3, window_bounds = array<i64: 1, 8, 128>}]} {
    %c0_i32 = arith.constant 0 : i32
    %0 = arith.cmpi eq, %arg2, %c0_i32 : i32
    %1 = arith.extui %0 : i1 to i32
    %c0_i32_0 = arith.constant 0 : i32
    %2 = arith.cmpi ne, %1, %c0_i32_0 : i32
    scf.if %2 {
      %cst_29 = arith.constant 0.000000e+00 : f32
      %47 = vector.broadcast %cst_29 : f32 to vector<1x8x128xf32>
      %c0_30 = arith.constant 0 : index
      %c0_31 = arith.constant 0 : index
      %c0_32 = arith.constant 0 : index
      %48 = vector.load %arg5[%c0_30, %c0_31, %c0_32] : memref<1x8x128xf32, #tpu.memory_space<vmem>>, vector<1x8x128xf32>
      tpu.vector_store %arg5[%c0_30, %c0_31, %c0_32], %47 {strides = array<i32>} : memref<1x8x128xf32, #tpu.memory_space<vmem>>, vector<1x8x128xf32>,
      %cst_33 = arith.constant 0.000000e+00 : f32
      %49 = vector.broadcast %cst_33 : f32 to vector<1x8x128xf32>
      %c0_34 = arith.constant 0 : index
      %c0_35 = arith.constant 0 : index
      %c0_36 = arith.constant 0 : index
      %50 = vector.load %arg6[%c0_34, %c0_35, %c0_36] : memref<1x8x128xf32, #tpu.memory_space<vmem>>, vector<1x8x128xf32>
      tpu.vector_store %arg6[%c0_34, %c0_35, %c0_36], %49 {strides = array<i32>} : memref<1x8x128xf32, #tpu.memory_space<vmem>>, vector<1x8x128xf32>,
    } else {
    }
    %c0 = arith.constant 0 : index
    %c0_1 = arith.constant 0 : index
    %c0_2 = arith.constant 0 : index
    %c0_3 = arith.constant 0 : index
    %3 = vector.load %arg3[%c0, %c0_1, %c0_2, %c0_3] : memref<1x4x2x128xf32, #tpu.memory_space<vmem>>, vector<1x4x2x128xf32>
    %4 = vector.shape_cast %3 : vector<1x4x2x128xf32> to vector<4x2x128xf32>
    %c0_4 = arith.constant 0 : index
    %c0_5 = arith.constant 0 : index
    %c0_6 = arith.constant 0 : index
    %c0_7 = arith.constant 0 : index
    %5 = vector.load %arg4[%c0_4, %c0_5, %c0_6, %c0_7] : memref<1x4x2x128xf32, #tpu.memory_space<vmem>>, vector<1x4x2x128xf32>
    %6 = vector.shape_cast %5 : vector<1x4x2x128xf32> to vector<4x2x128xf32>
    %cst = arith.constant 2.550000e+02 : f32
    %7 = vector.broadcast %cst : f32 to vector<4x2x128xf32>
    %8 = arith.cmpf one, %6, %7 : vector<4x2x128xf32>
    %9 = arith.subf %4, %6 : vector<4x2x128xf32>
    %10 = math.absf %9 : vector<4x2x128xf32>
    %cst_8 = arith.constant 0.000000e+00 : f32
    %11 = vector.broadcast %cst_8 : f32 to vector<4x2x128xf32>
    %12 = arith.select %8, %10, %11 : vector<4x2x128xi1>, vector<4x2x128xf32>
    %cst_9 = arith.constant dense<0.000000e+00> : vector<2x128xf32>
    %13 = vector.multi_reduction <add>, %12, %cst_9 [0] : vector<4x2x128xf32> to vector<2x128xf32>
    %cst_10 = arith.constant dense<0.000000e+00> : vector<128xf32>
    %14 = vector.multi_reduction <add>, %13, %cst_10 [0] : vector<2x128xf32> to vector<128xf32>
    %15 = vector.shape_cast %14 : vector<128xf32> to vector<1x128xf32>
    %16 = tpu.iota {dimensions = array<i32: 0>} : vector<8x128xi32>
    %c0_11 = arith.constant 0 : index
    %c0_12 = arith.constant 0 : index
    %c0_13 = arith.constant 0 : index
    %17 = vector.load %arg5[%c0_11, %c0_12, %c0_13] : memref<1x8x128xf32, #tpu.memory_space<vmem>>, vector<1x8x128xf32>
    %18 = vector.shape_cast %17 : vector<1x8x128xf32> to vector<8x128xf32>
    %c0_i32_14 = arith.constant 0 : i32
    %19 = vector.broadcast %c0_i32_14 : i32 to vector<8x128xi32>
    %20 = arith.cmpi eq, %16, %19 : vector<8x128xi32>
    %cst_15 = arith.constant 0.000000e+00 : f32
    %21 = vector.shape_cast %15 : vector<1x128xf32> to vector<1x128xf32>
    %22 = vector.broadcast %21 : vector<1x128xf32> to vector<8x128xf32>
    %23 = vector.broadcast %cst_15 : f32 to vector<8x128xf32>
    %24 = arith.select %20, %22, %23 : vector<8x128xi1>, vector<8x128xf32>
    %25 = arith.addf %18, %24 : vector<8x128xf32>
    %c0_16 = arith.constant 0 : index
    %c0_17 = arith.constant 0 : index
    %c0_18 = arith.constant 0 : index
    %26 = vector.load %arg5[%c0_16, %c0_17, %c0_18] : memref<1x8x128xf32, #tpu.memory_space<vmem>>, vector<1x8x128xf32>
    %27 = vector.shape_cast %26 : vector<1x8x128xf32> to vector<8x128xf32>
    %28 = vector.shape_cast %25 : vector<8x128xf32> to vector<1x8x128xf32>
    tpu.vector_store %arg5[%c0_16, %c0_17, %c0_18], %28 {strides = array<i32>} : memref<1x8x128xf32, #tpu.memory_space<vmem>>, vector<1x8x128xf32>,
    %29 = arith.extui %8 : vector<4x2x128xi1> to vector<4x2x128xi32>
    %30 = arith.sitofp %29 : vector<4x2x128xi32> to vector<4x2x128xf32>
    %cst_19 = arith.constant dense<0.000000e+00> : vector<2x128xf32>
    %31 = vector.multi_reduction <add>, %30, %cst_19 [0] : vector<4x2x128xf32> to vector<2x128xf32>
    %cst_20 = arith.constant dense<0.000000e+00> : vector<128xf32>
    %32 = vector.multi_reduction <add>, %31, %cst_20 [0] : vector<2x128xf32> to vector<128xf32>
    %33 = vector.shape_cast %32 : vector<128xf32> to vector<1x128xf32>
    %34 = tpu.iota {dimensions = array<i32: 0>} : vector<8x128xi32>
    %c0_21 = arith.constant 0 : index
    %c0_22 = arith.constant 0 : index
    %c0_23 = arith.constant 0 : index
    %35 = vector.load %arg6[%c0_21, %c0_22, %c0_23] : memref<1x8x128xf32, #tpu.memory_space<vmem>>, vector<1x8x128xf32>
    %36 = vector.shape_cast %35 : vector<1x8x128xf32> to vector<8x128xf32>
    %c0_i32_24 = arith.constant 0 : i32
    %37 = vector.broadcast %c0_i32_24 : i32 to vector<8x128xi32>
    %38 = arith.cmpi eq, %34, %37 : vector<8x128xi32>
    %cst_25 = arith.constant 0.000000e+00 : f32
    %39 = vector.shape_cast %33 : vector<1x128xf32> to vector<1x128xf32>
    %40 = vector.broadcast %39 : vector<1x128xf32> to vector<8x128xf32>
    %41 = vector.broadcast %cst_25 : f32 to vector<8x128xf32>
    %42 = arith.select %38, %40, %41 : vector<8x128xi1>, vector<8x128xf32>
    %43 = arith.addf %36, %42 : vector<8x128xf32>
    %c0_26 = arith.constant 0 : index
    %c0_27 = arith.constant 0 : index
    %c0_28 = arith.constant 0 : index
    %44 = vector.load %arg6[%c0_26, %c0_27, %c0_28] : memref<1x8x128xf32, #tpu.memory_space<vmem>>, vector<1x8x128xf32>
    %45 = vector.shape_cast %44 : vector<1x8x128xf32> to vector<8x128xf32>
    %46 = vector.shape_cast %43 : vector<8x128xf32> to vector<1x8x128xf32>
    tpu.vector_store %arg6[%c0_26, %c0_27, %c0_28], %46 {strides = array<i32>} : memref<1x8x128xf32, #tpu.memory_space<vmem>>, vector<1x8x128xf32>,
    return
  }
  func.func @transform_0(%arg0: i32, %arg1: i32, %arg2: i32) -> (i32, i32, i32, i32) {
    %c1_i32 = arith.constant 1 : i32
    %0 = arith.muli %arg1, %c1_i32 : i32
    %1 = arith.addi %0, %arg2 : i32
    %c0_i32 = arith.constant 0 : i32
    %c0_i32_0 = arith.constant 0 : i32
    %c0_i32_1 = arith.constant 0 : i32
    return %arg0, %c0_i32, %1, %c0_i32_0 : i32, i32, i32, i32
  }
  func.func @transform_1(%arg0: i32, %arg1: i32, %arg2: i32) -> (i32, i32, i32, i32) {
    %c1_i32 = arith.constant 1 : i32
    %0 = arith.muli %arg1, %c1_i32 : i32
    %1 = arith.addi %0, %arg2 : i32
    %c0_i32 = arith.constant 0 : i32
    %c0_i32_0 = arith.constant 0 : i32
    %c0_i32_1 = arith.constant 0 : i32
    return %arg0, %c0_i32, %1, %c0_i32_0 : i32, i32, i32, i32
  }
  func.func @transform_2(%arg0: i32, %arg1: i32, %arg2: i32) -> (i32, i32, i32) {
    %c1_i32 = arith.constant 1 : i32
    %0 = arith.muli %arg0, %c1_i32 : i32
    %1 = arith.addi %0, %arg1 : i32
    %c0_i32 = arith.constant 0 : i32
    %c0_i32_0 = arith.constant 0 : i32
    %c0_i32_1 = arith.constant 0 : i32
    return %1, %c0_i32, %c0_i32_0 : i32, i32, i32
  }
  func.func @transform_3(%arg0: i32, %arg1: i32, %arg2: i32) -> (i32, i32, i32) {
    %c1_i32 = arith.constant 1 : i32
    %0 = arith.muli %arg0, %c1_i32 : i32
    %1 = arith.addi %0, %arg1 : i32
    %c0_i32 = arith.constant 0 : i32
    %c0_i32_0 = arith.constant 0 : i32
    %c0_i32_1 = arith.constant 0 : i32
    return %1, %c0_i32, %c0_i32_0 : i32, i32, i32
  }
}

</mosaic_0001>

<llo_original>
// kernel: tpu_custom_call.1
$region0: #{tpu_custom_call.1}
  #allocation0 [shape = 'u32[]', space=smem, size = 0x4, offset = 0x4, fixed_abs, tag = 'smem constant byte address 0x4 - core index']
  #allocation1 [shape = 'u32[144,128]{1,0:T(1,128)}', space=vmem, size = 0x12000, scoped, tag = 'internal scratch']
  %s0 = inlined_call_operand.hbm [shape: f32[2,4,2,128], index: 0, kind: input, shape index: {}]
  %s1 = inlined_call_operand.hbm [shape: f32[2,4,2,128], index: 1, kind: input, shape index: {}]
  %s2 = inlined_call_operand.hbm [shape: f32[2,8,128], index: 2, kind: output, shape index: {0}]
  %s3 = inlined_call_operand.hbm [shape: f32[2,8,128], index: 3, kind: output, shape index: {1}]
  %4 = xla_tuple %s2, %s3
  %s5 = sld [smem:[#allocation0]]
  $region61: #{tpu_custom_call.1} parent=0
    _
  %s7 = ssub.s32 1, %s5
  %s8 = scalar_select 0, %s7, %s5
  $region1: #{tpu_custom_call.1} parent=0
    #allocation2 [shape = 'u8[8192]{0}', space=vmem, size = 0x2000, scoped, tag = 'input window, operand 0']
    #allocation3 [shape = 's32[2]{0}', space=sflag, size = 0x8, scoped, tag = 'scoped memory for tpu_custom_call.1']
    #allocation4 [shape = 's32[2]{0}', space=sflag, size = 0x8, scoped, tag = 'scoped memory for tpu_custom_call.1']
    #allocation5 [shape = 'u8[8192]{0}', space=vmem, size = 0x2000, scoped, tag = 'input window, operand 1']
    #allocation6 [shape = 's32[2]{0}', space=sflag, size = 0x8, scoped, tag = 'scoped memory for tpu_custom_call.1']
    #allocation7 [shape = 'u8[8192]{0}', space=vmem, size = 0x2000, scoped, tag = 'output window, operand 0']
    #allocation8 [shape = 'u8[8192]{0}', space=vmem, size = 0x2000, scoped, tag = 'output window, operand 1']
    #allocation9 [shape = 's32[2]{0}', space=sflag, size = 0x8, scoped, tag = 'scoped memory for tpu_custom_call.1']
    %9 = vsyncpa [#allocation3], 0
    %s10 = scalar_lea.sflag [#allocation3], 1
    %11 = vsyncpa %s10, 0
    %12 = vsyncpa [#allocation6], 0
    %s13 = scalar_lea.sflag [#allocation6], 1
    %14 = vsyncpa %s13, 0
    %15 = vsyncpa [#allocation4], 0
    %s16 = scalar_lea.sflag [#allocation4], 1
    %17 = vsyncpa %s16, 0
    %18 = vsyncpa [#allocation9], 0
    %s19 = scalar_lea.sflag [#allocation9], 1
    %20 = vsyncpa %s19, 0
    loop: start=0, step=1, limit=4
    $region2: #{tpu_custom_call.1} parent=1 // loop_pre_header
      _
    $region3: #{tpu_custom_call.1} parent=1 // loop_header
      %s22 = sphi 0, %s26
      %p23 = scmp.ge.s32.totalorder %s22, 4
      %s29 = sphi 0, %s48
      %s30 = sphi 0, %s44
      %s31 = sphi 0, %s40
      %s32 = sphi 0, %s29
      %s33 = sphi 0, %s30
      %s34 = sphi 0, %s31
      %s35 = sphi 0, %s32
      %s36 = sphi 0, %s33
      %s37 = sphi 0, %s34
      %s55 = sphi 0, %s57
      %s58 = sphi 0, %s55
      %s59 = sphi 0, %s58
      %s75 = sphi 0, %s59
      %s85 = sphi 0, %s87
      %s88 = sphi 0, %s85
      %s89 = sphi 0, %s88
      %s105 = sphi 0, %s89
      %s113 = sphi 0, %s115
      %s116 = sphi 0, %s113
      %s117 = sphi 0, %s116
      %s133 = sphi 0, %s117
      %s141 = sphi 0, %s143
      %s144 = sphi 0, %s141
      %s145 = sphi 0, %s144
      %s161 = sphi 0, %s145
    $region4: #{tpu_custom_call.1} parent=1 // loop_header_branch
      %25 = sbr.rel (%p23) target = $region8
    $region5: #{tpu_custom_call.1} parent=1 // loop_body
      %s27 = ssub.s32 %s22, 1
      %s28 = ssub.s32 %s22, 2
      %s38 = sadd.s32 1, %s31
      %p39 = scmp.ge.s32.totalorder %s38, 1
      %s40 = scalar_select %p39, 0, %s38
      %s41 = sadd.s32 1, %s30
      %s42 = scalar_select %p39, %s41, %s30
      %p43 = scmp.ge.s32.totalorder %s42, 1
      %s44 = scalar_select %p43, 0, %s42
      %s45 = sadd.s32 1, %s29
      %s46 = scalar_select %p43, %s45, %s29
      %p47 = scmp.ge.s32.totalorder %s46, 2
      %s48 = scalar_select %p47, 0, %s46
      %s49 = sadd.s32 %s30, %s31
      %s50 = sadd.s32 %s44, %s40
      %s51 = ssub.s32 %s29, %s48
      %s52 = ssub.s32 %s49, %s50
      %s53 = sor.u32 %s51, %s52
      %p54 = scmp.eq.s32.totalorder %s53, 0
      %s56 = sadd.s32 %s55, 1
      %s57 = scalar_select %p54, %s55, %s56
      %p60 = pneg %p54
      %p61 = scmp.eq.s32.totalorder %s22, 1
      %p62 = por %p60, %p61
      %p63 = scmp.ne.s32.totalorder %s55, %s58
      %p64 = scmp.eq.s32.totalorder %s22, 0
      %p65 = por %p63, %p64
      %p66 = scmp.ne.s32.totalorder %s55, %s58
      %p67 = scmp.eq.s32.totalorder %s27, 1
      %p68 = por %p66, %p67
      %p69 = scmp.ne.s32.totalorder %s58, %s59
      %p70 = scmp.eq.s32.totalorder %s27, 0
      %p71 = por %p69, %p70
      %p72 = scmp.ne.s32.totalorder %s58, %s59
      %p73 = scmp.eq.s32.totalorder %s28, 1
      %p74 = por %p72, %p73
      %p76 = scmp.ne.s32.totalorder %s59, %s75
      %p77 = scmp.eq.s32.totalorder %s28, 0
      %p78 = por %p76, %p77
      %s79 = sadd.s32 %s30, %s31
      %s80 = sadd.s32 %s44, %s40
      %s81 = ssub.s32 %s29, %s48
      %s82 = ssub.s32 %s79, %s80
      %s83 = sor.u32 %s81, %s82
      %p84 = scmp.eq.s32.totalorder %s83, 0
      %s86 = sadd.s32 %s85, 1
      %s87 = scalar_select %p84, %s85, %s86
      %p90 = pneg %p84
      %p91 = scmp.eq.s32.totalorder %s22, 1
      %p92 = por %p90, %p91
      %p93 = scmp.ne.s32.totalorder %s85, %s88
      %p94 = scmp.eq.s32.totalorder %s22, 0
      %p95 = por %p93, %p94
      %p96 = scmp.ne.s32.totalorder %s85, %s88
      %p97 = scmp.eq.s32.totalorder %s27, 1
      %p98 = por %p96, %p97
      %p99 = scmp.ne.s32.totalorder %s88, %s89
      %p100 = scmp.eq.s32.totalorder %s27, 0
      %p101 = por %p99, %p100
      %p102 = scmp.ne.s32.totalorder %s88, %s89
      %p103 = scmp.eq.s32.totalorder %s28, 1
      %p104 = por %p102, %p103
      %p106 = scmp.ne.s32.totalorder %s89, %s105
      %p107 = scmp.eq.s32.totalorder %s28, 0
      %p108 = por %p106, %p107
      %s109 = sadd.s32 %s29, %s30
      %s110 = sadd.s32 %s48, %s44
      %s111 = ssub.s32 %s109, %s110
      %p112 = scmp.eq.s32.totalorder %s111, 0
      %s114 = sadd.s32 %s113, 1
      %s115 = scalar_select %p112, %s113, %s114
      %p118 = pneg %p112
      %p119 = scmp.eq.s32.totalorder %s22, 1
      %p120 = por %p118, %p119
      %p121 = scmp.ne.s32.totalorder %s113, %s116
      %p122 = scmp.eq.s32.totalorder %s22, 0
      %p123 = por %p121, %p122
      %p124 = scmp.ne.s32.totalorder %s113, %s116
      %p125 = scmp.eq.s32.totalorder %s27, 1
      %p126 = por %p124, %p125
      %p127 = scmp.ne.s32.totalorder %s116, %s117
      %p128 = scmp.eq.s32.totalorder %s27, 0
      %p129 = por %p127, %p128
      %p130 = scmp.ne.s32.totalorder %s116, %s117
      %p131 = scmp.eq.s32.totalorder %s28, 1
      %p132 = por %p130, %p131
      %p134 = scmp.ne.s32.totalorder %s117, %s133
      %p135 = scmp.eq.s32.totalorder %s28, 0
      %p136 = por %p134, %p135
      %s137 = sadd.s32 %s29, %s30
      %s138 = sadd.s32 %s48, %s44
      %s139 = ssub.s32 %s137, %s138
      %p140 = scmp.eq.s32.totalorder %s139, 0
      %s142 = sadd.s32 %s141, 1
      %s143 = scalar_select %p140, %s141, %s142
      %p146 = pneg %p140
      %p147 = scmp.eq.s32.totalorder %s22, 1
      %p148 = por %p146, %p147
      %p149 = scmp.ne.s32.totalorder %s141, %s144
      %p150 = scmp.eq.s32.totalorder %s22, 0
      %p151 = por %p149, %p150
      %p152 = scmp.ne.s32.totalorder %s141, %s144
      %p153 = scmp.eq.s32.totalorder %s27, 1
      %p154 = por %p152, %p153
      %p155 = scmp.ne.s32.totalorder %s144, %s145
      %p156 = scmp.eq.s32.totalorder %s27, 0
      %p157 = por %p155, %p156
      %p158 = scmp.ne.s32.totalorder %s144, %s145
      %p159 = scmp.eq.s32.totalorder %s28, 1
      %p160 = por %p158, %p159
      %p162 = scmp.ne.s32.totalorder %s145, %s161
      %p163 = scmp.eq.s32.totalorder %s28, 0
      %p164 = por %p162, %p163
      %p165 = scmp.le.s32.totalorder 1, %s22
      %p166 = scmp.lt.s32.totalorder %s22, 3
      %p167 = pnand %p165, %p166
      %p168 = pneg %p167
      // Predicated region
      $region9: #{tpu_custom_call.1} parent=5 // pred_check
        _
      $region10: #{tpu_custom_call.1} parent=5 // pred_check_branch
        %170 = sbr.rel (%p167) target = $region12
      $region11: #{tpu_custom_call.1} parent=5 // pred_region
        %s171 = ssub.s32 %s22, 1
      $region12: #{tpu_custom_call.1} parent=5 // pred_fallthru
        _
      %p172 = scmp.lt.s32.totalorder %s22, 2
      // Predicated region
      $region13: #{tpu_custom_call.1} parent=5 // pred_check
        %p173 = pneg %p172
      $region14: #{tpu_custom_call.1} parent=5 // pred_check_branch
        %175 = sbr.rel (%p173) target = $region16
      $region15: #{tpu_custom_call.1} parent=5 // pred_region
        // Predicated region
        $region17: #{tpu_custom_call.1} parent=15 // pred_check
          %p176 = pneg %p65
        $region18: #{tpu_custom_call.1} parent=15 // pred_check_branch
          %178 = sbr.rel (%p176) target = $region20
        $region19: #{tpu_custom_call.1} parent=15 // pred_region
          %s179 = sand.u32 %s55, 1
          %s180 = scalar_lea.sflag [#allocation3], %s179
          %s181 = sand.u32 %s55, 1
          %s182 = smul.addr %s181, 8
          %s183 = scalar_lea.vmem [#allocation2], %s182
          %s184 = sadd.s32 %s30, %s31
          %s186 = ssub.s32 128, 128
          %187 = vsyncadd %s180, %s186
          %s188 = smul.addr %s29, 4
          %s189 = sadd.s32 %s184, %s188
          %s190 = smul.addr %s189, 32
          %s191 = scalar_lea.hbm %s0, %s190
          %s192 = sshll.u32 %s183, 4
          %s193 = int_to_ptr.vmem [resolvable:$true] %s192
          %198 = dma.hbm_to_vmem [thread:$0]  %s191, 128, %s193, %s180, 32, 32, 2
        $region20: #{tpu_custom_call.1} parent=15 // pred_fallthru
          _
        // Predicated region
        $region21: #{tpu_custom_call.1} parent=15 // pred_check
          %p199 = pneg %p95
        $region22: #{tpu_custom_call.1} parent=15 // pred_check_branch
          %201 = sbr.rel (%p199) target = $region24
        $region23: #{tpu_custom_call.1} parent=15 // pred_region
          %s202 = sand.u32 %s85, 1
          %s203 = scalar_lea.sflag [#allocation6], %s202
          %s204 = sand.u32 %s85, 1
          %s205 = smul.addr %s204, 8
          %s206 = scalar_lea.vmem [#allocation5], %s205
          %s207 = sadd.s32 %s30, %s31
          %s209 = ssub.s32 128, 128
          %210 = vsyncadd %s203, %s209
          %s211 = smul.addr %s29, 4
          %s212 = sadd.s32 %s207, %s211
          %s213 = smul.addr %s212, 32
          %s214 = scalar_lea.hbm %s1, %s213
          %s215 = sshll.u32 %s206, 4
          %s216 = int_to_ptr.vmem [resolvable:$true] %s215
          %221 = dma.hbm_to_vmem [thread:$0]  %s214, 128, %s216, %s203, 32, 32, 2
        $region24: #{tpu_custom_call.1} parent=15 // pred_fallthru
          _
      $region16: #{tpu_custom_call.1} parent=5 // pred_fallthru
        _
      %p222 = scmp.le.s32.totalorder 1, %s22
      %p223 = scmp.lt.s32.totalorder %s22, 3
      %p224 = pnand %p222, %p223
      %p225 = pneg %p224
      // Predicated region
      $region25: #{tpu_custom_call.1} parent=5 // pred_check
        _
      $region26: #{tpu_custom_call.1} parent=5 // pred_check_branch
        %227 = sbr.rel (%p224) target = $region28
      $region27: #{tpu_custom_call.1} parent=5 // pred_region
        %s228 = ssub.s32 %s22, 1
        %s229 = sand.u32 %s58, 1
        %s230 = scalar_lea.sflag [#allocation3], %s229
        %s231 = sand.u32 %s58, 1
        %s232 = smul.addr %s231, 8
        %s233 = scalar_lea.vmem [#allocation2], %s232
        // Predicated region
        $region29: #{tpu_custom_call.1} parent=27 // pred_check
          %p234 = pneg %p71
        $region30: #{tpu_custom_call.1} parent=27 // pred_check_branch
          %236 = sbr.rel (%p234) target = $region32
        $region31: #{tpu_custom_call.1} parent=27 // pred_region
          %237 = dma.done %s230, 128
        $region32: #{tpu_custom_call.1} parent=27 // pred_fallthru
          _
        %s238 = sand.u32 %s88, 1
        %s239 = scalar_lea.sflag [#allocation6], %s238
        %s240 = sand.u32 %s88, 1
        %s241 = smul.addr %s240, 8
        %s242 = scalar_lea.vmem [#allocation5], %s241
        // Predicated region
        $region33: #{tpu_custom_call.1} parent=27 // pred_check
          %p243 = pneg %p101
        $region34: #{tpu_custom_call.1} parent=27 // pred_check_branch
          %245 = sbr.rel (%p243) target = $region36
        $region35: #{tpu_custom_call.1} parent=27 // pred_region
          %246 = dma.done %s239, 128
        $region36: #{tpu_custom_call.1} parent=27 // pred_fallthru
          _
        %s247 = sand.u32 %s58, 1
        %s248 = scalar_lea.sflag [#allocation3], %s247
        %s249 = sand.u32 %s58, 1
        %s250 = smul.addr %s249, 8
        %s251 = scalar_lea.vmem [#allocation2], %s250
        %p252 = pneg %p71
        %p253 = pneg %p68
        %s254 = sand.u32 %s88, 1
        %s255 = scalar_lea.sflag [#allocation6], %s254
        %s256 = sand.u32 %s88, 1
        %s257 = smul.addr %s256, 8
        %s258 = scalar_lea.vmem [#allocation5], %s257
        %p259 = pneg %p101
        %p260 = pneg %p98
        %p261 = pneg %p129
        %p262 = pneg %p126
        %s263 = sand.u32 %s116, 1
        %s264 = scalar_lea.sflag [#allocation4], %s263
        %s265 = sand.u32 %s116, 1
        %s266 = smul.addr %s265, 8
        %s267 = scalar_lea.vmem [#allocation7], %s266
        %p268 = pneg %p157
        %p269 = pneg %p154
        %s270 = sand.u32 %s144, 1
        %s271 = scalar_lea.sflag [#allocation9], %s270
        %s272 = sand.u32 %s144, 1
        %s273 = smul.addr %s272, 8
        %s274 = scalar_lea.vmem [#allocation8], %s273
        %s275 = sadd.s32 %s33, %s34
        %s276 = sadd.s32 %s33, %s34
        %s277 = sadd.s32 %s32, %s33
        %s278 = sadd.s32 %s32, %s33
        %p279 = scmp.eq.s32.totalorder %s34, 0
        // Predicated region
        $region37: #{tpu_custom_call.1} parent=27 // pred_check
          %p280 = pneg %p279
        $region38: #{tpu_custom_call.1} parent=27 // pred_check_branch
          %282 = sbr.rel (%p280) target = $region40
        $region39: #{tpu_custom_call.1} parent=27 // pred_region
          %283 = vst [vmem:[%s267] sm:$0xff] 0.0
          %284 = vst [vmem:[%s274] sm:$0xff] 0.0
        $region40: #{tpu_custom_call.1} parent=27 // pred_fallthru
          _
        %v285 = vld [vmem:[%s233] sm:$0x3]
        %v286 = vld [vmem:[%s233 + $0x2] sm:$0x3]
        %v287 = vld [vmem:[%s233 + $0x4] sm:$0x3]
        %v288 = vld [vmem:[%s233 + $0x6] sm:$0x3]
        %v289 = vld [vmem:[%s242] sm:$0x3]
        %v290 = vld [vmem:[%s242 + $0x2] sm:$0x3]
        %v291 = vld [vmem:[%s242 + $0x4] sm:$0x3]
        %v292 = vld [vmem:[%s242 + $0x6] sm:$0x3]
        %vm293 = vcmp.ne.f32.partialorder %v289, 255.0
        %vm294 = vcmp.ne.f32.partialorder %v290, 255.0
        %vm295 = vcmp.ne.f32.partialorder %v291, 255.0
        %vm296 = vcmp.ne.f32.partialorder %v292, 255.0
        %v297 = vsub.f32 %v285, %v289
        %v298 = vsub.f32 %v286, %v290
        %v299 = vsub.f32 %v287, %v291
        %v300 = vsub.f32 %v288, %v292
        %v301 = vand.u32 2147483647, %v297
        %v302 = vand.u32 2147483647, %v298
        %v303 = vand.u32 2147483647, %v299
        %v304 = vand.u32 2147483647, %v300
        %v305 = vsel %vm293, %v301, 0.0
        %v306 = vsel %vm294, %v302, 0.0
        %v307 = vsel %vm295, %v303, 0.0
        %v308 = vsel %vm296, %v304, 0.0
        %vm309 = vcmask 1041408
        %v310 = vsel %vm309, %v305, 0.0
        %v311 = vsel %vm309, %v306, 0.0
        %v312 = vadd.f32 %v310, %v311
        %v313 = vsel %vm309, %v307, 0.0
        %v314 = vadd.f32 %v312, %v313
        %v315 = vsel %vm309, %v308, 0.0
        %v316 = vadd.f32 %v314, %v315
        %v317 = vsel %vm309, %v316, 0.0
        %v318 = vrot.slane %v317, 4
        %v319 = vadd.f32 %v317, %v318
        %v320 = vrot.slane %v319, 2
        %v321 = vadd.f32 %v319, %v320
        %v322 = vrot.slane %v321, 1
        %v323 = vadd.f32 %v321, %v322
        %v324 = vlaneseq
        %v325 = vshrl.u32 %v324, 7
        %v326 = vld [vmem:[%s267] sm:$0xff]
        %vm327 = vcmp.eq.s32.totalorder %v325, 0
        %v328 = vsel %vm327, %v323, 0.0
        %v329 = vadd.f32 %v326, %v328
        %330 = vst [vmem:[%s267] sm:$0xff] %v329
        %v331 = vsel %vm293, 1, 0
        %v332 = vsel %vm294, 1, 0
        %v333 = vsel %vm295, 1, 0
        %v334 = vsel %vm296, 1, 0
        %v335 = vcvt.s32.f32 %v331
        %v336 = vcvt.s32.f32 %v332
        %v337 = vcvt.s32.f32 %v333
        %v338 = vcvt.s32.f32 %v334
        %v339 = vsel %vm309, %v335, 0.0
        %v340 = vsel %vm309, %v336, 0.0
        %v341 = vadd.f32 %v339, %v340
        %v342 = vsel %vm309, %v337, 0.0
        %v343 = vadd.f32 %v341, %v342
        %v344 = vsel %vm309, %v338, 0.0
        %v345 = vadd.f32 %v343, %v344
        %v346 = vsel %vm309, %v345, 0.0
        %v347 = vrot.slane %v346, 4
        %v348 = vadd.f32 %v346, %v347
        %v349 = vrot.slane %v348, 2
        %v350 = vadd.f32 %v348, %v349
        %v351 = vrot.slane %v350, 1
        %v352 = vadd.f32 %v350, %v351
        %v353 = vld [vmem:[%s274] sm:$0xff]
        %v354 = vsel %vm327, %v352, 0.0
        %v355 = vadd.f32 %v353, %v354
        %356 = vst [vmem:[%s274] sm:$0xff] %v355
        %s357 = sand.u32 %s116, 1
        %s358 = scalar_lea.sflag [#allocation4], %s357
        %s359 = sand.u32 %s116, 1
        %s360 = smul.addr %s359, 8
        %s361 = scalar_lea.vmem [#allocation7], %s360
        %s362 = sand.u32 %s144, 1
        %s363 = scalar_lea.sflag [#allocation9], %s362
        %s364 = sand.u32 %s144, 1
        %s365 = smul.addr %s364, 8
        %s366 = scalar_lea.vmem [#allocation8], %s365
        // Predicated region
        $region41: #{tpu_custom_call.1} parent=27 // pred_check
          %p367 = pneg %p126
        $region42: #{tpu_custom_call.1} parent=27 // pred_check_branch
          %369 = sbr.rel (%p367) target = $region44
        $region43: #{tpu_custom_call.1} parent=27 // pred_region
          %s370 = sadd.s32 %s32, %s33
          %s372 = ssub.s32 128, 128
          %373 = vsyncadd %s358, %s372
          %s374 = smul.addr %s370, 128
          %s375 = scalar_lea.hbm %s2, %s374
          %s377 = sshll.u32 %s361, 4
          %s378 = int_to_ptr.vmem [resolvable:$true] %s377
          %380 = dma.vmem_to_hbm [thread:$0]  %s378, 128, %s375, %s358
        $region44: #{tpu_custom_call.1} parent=27 // pred_fallthru
          _
        // Predicated region
        $region45: #{tpu_custom_call.1} parent=27 // pred_check
          %p381 = pneg %p154
        $region46: #{tpu_custom_call.1} parent=27 // pred_check_branch
          %383 = sbr.rel (%p381) target = $region48
        $region47: #{tpu_custom_call.1} parent=27 // pred_region
          %s384 = sadd.s32 %s32, %s33
          %s386 = ssub.s32 128, 128
          %387 = vsyncadd %s363, %s386
          %s388 = smul.addr %s384, 128
          %s389 = scalar_lea.hbm %s3, %s388
          %s391 = sshll.u32 %s366, 4
          %s392 = int_to_ptr.vmem [resolvable:$true] %s391
          %394 = dma.vmem_to_hbm [thread:$0]  %s392, 128, %s389, %s363
        $region48: #{tpu_custom_call.1} parent=27 // pred_fallthru
          _
      $region28: #{tpu_custom_call.1} parent=5 // pred_fallthru
        _
      %p395 = scmp.le.s32.totalorder 2, %s22
      // Predicated region
      $region49: #{tpu_custom_call.1} parent=5 // pred_check
        %p396 = pneg %p395
      $region50: #{tpu_custom_call.1} parent=5 // pred_check_branch
        %398 = sbr.rel (%p396) target = $region52
      $region51: #{tpu_custom_call.1} parent=5 // pred_region
        %s399 = ssub.s32 %s22, 2
        // Predicated region
        $region53: #{tpu_custom_call.1} parent=51 // pred_check
          %p400 = pneg %p132
        $region54: #{tpu_custom_call.1} parent=51 // pred_check_branch
          %402 = sbr.rel (%p400) target = $region56
        $region55: #{tpu_custom_call.1} parent=51 // pred_region
          %s403 = sand.u32 %s117, 1
          %s404 = scalar_lea.sflag [#allocation4], %s403
          %s405 = sand.u32 %s117, 1
          %s406 = smul.addr %s405, 8
          %s407 = scalar_lea.vmem [#allocation7], %s406
          %408 = dma.done %s404, 128
        $region56: #{tpu_custom_call.1} parent=51 // pred_fallthru
          _
        // Predicated region
        $region57: #{tpu_custom_call.1} parent=51 // pred_check
          %p409 = pneg %p160
        $region58: #{tpu_custom_call.1} parent=51 // pred_check_branch
          %411 = sbr.rel (%p409) target = $region60
        $region59: #{tpu_custom_call.1} parent=51 // pred_region
          %s412 = sand.u32 %s145, 1
          %s413 = scalar_lea.sflag [#allocation9], %s412
          %s414 = sand.u32 %s145, 1
          %s415 = smul.addr %s414, 8
          %s416 = scalar_lea.vmem [#allocation8], %s415
          %417 = dma.done %s413, 128
        $region60: #{tpu_custom_call.1} parent=51 // pred_fallthru
          _
      $region52: #{tpu_custom_call.1} parent=5 // pred_fallthru
        _
    $region6: #{tpu_custom_call.1} parent=1 // loop_footer
      %s26 = sadd.s32 1, %s22
    $region7: #{tpu_custom_call.1} parent=1 // loop_footer_branch
      %21 = sbr.rel target = $region3
    $region8: #{tpu_custom_call.1} parent=1 // loop_exit
      _
    %418 = vsyncpa [#allocation3], 1
    %s419 = scalar_lea.sflag [#allocation3], 1
    %420 = vsyncpa %s419, 1
    %421 = vsyncpa [#allocation6], 1
    %s422 = scalar_lea.sflag [#allocation6], 1
    %423 = vsyncpa %s422, 1
    %424 = vsyncpa [#allocation4], 1
    %s425 = scalar_lea.sflag [#allocation4], 1
    %426 = vsyncpa %s425, 1
    %427 = vsyncpa [#allocation9], 1
    %s428 = scalar_lea.sflag [#allocation9], 1
    %429 = vsyncpa %s428, 1

</llo_original>
